<compile_context>
chip_gen: v7x
topology: tpu7x:2x2x1
jax: 0.10.0
libtpu: 0.0.40
codegen_flags: <defaults>
</compile_context>

<pallas_src>
import math
import functools

import jax
import jax.numpy as jnp
import numpy as np
from jax import lax
from jax.experimental import pallas as pl
from jax.experimental.pallas import tpu as pltpu


def _mha_kernel(q_ref, k_ref, v_ref,
                wq_ref, bq_ref, wk_ref, bk_ref, wv_ref, bv_ref,
                wo_ref, bo_ref,
                o_ref,
                acc_ref,
                *, inv_scale: float):
    """Grid = (batch, q-tile, head); one head of one q-tile per grid step.

    Shapes seen by the kernel:
      q_ref : (1, Tt, E)         k_ref / v_ref : (1, S, E)
      wq/wk/wv_ref : (1, E, D)   bq/bk/bv_ref  : (1, 1, D)
      wo_ref : (1, D, E)         bo_ref        : (1, E)
      o_ref : (1, Tt, E)         acc_ref (VMEM scratch) : (Tt, E) f32
    """
    h = pl.program_id(2)

    @pl.when(h == 0)
    def _():
        acc_ref[...] = jnp.zeros_like(acc_ref)

    q = q_ref[0]            # (Tt, E)
    k = k_ref[0]            # (S, E)
    v = v_ref[0]            # (S, E)

    # Per-head projections. Head slicing happens in the BlockSpec on the weights,
    # so there is no in-register lane slicing here. The 1/sqrt(D) scale is folded
    # into the projected Q once.
    qh = (jnp.dot(q, wq_ref[0], preferred_element_type=jnp.float32)
          + bq_ref[0]) * inv_scale                                              # (Tt, D)
    kh = jnp.dot(k, wk_ref[0], preferred_element_type=jnp.float32) + bk_ref[0]  # (S, D)
    vh = jnp.dot(v, wv_ref[0], preferred_element_type=jnp.float32) + bv_ref[0]  # (S, D)

    # Scores without materializing K^T: contract the last dim of both operands.
    s = lax.dot_general(qh, kh, (((1,), (1,)), ((), ())),
                        preferred_element_type=jnp.float32)                     # (Tt, S)

    # Numerically stable softmax (dim=-1); denominator reciprocal on the EUP.
    m = jnp.max(s, axis=-1, keepdims=True)
    e = jnp.exp(s - m)
    p = e * pl.reciprocal(jnp.sum(e, axis=-1, keepdims=True), approx=True)
    # dropout p=0.0 -> identity (eval semantics).

    ah = jnp.dot(p, vh, preferred_element_type=jnp.float32)                     # (Tt, D)

    # Output projection accumulated over heads into lane-dense (Tt, E) scratch:
    #   concat_h(ah) @ Wo == sum_h ah @ Wo[h*D:(h+1)*D, :]
    acc_ref[...] += jnp.dot(ah, wo_ref[0], preferred_element_type=jnp.float32)

    @pl.when(h == pl.num_programs(2) - 1)
    def _():
        o_ref[0] = (acc_ref[...] + bo_ref[...]).astype(o_ref.dtype)


def multihead_attention(q, k, v, params, *, num_heads: int, block_t: int = 256):
    """q: (B, T, E), k/v: (B, S, E). params: dict of weights/biases (see init_params)."""
    B, T, E = q.shape
    S = k.shape[1]
    assert E % num_heads == 0, "embed_dim must be divisible by num_heads"
    D = E // num_heads
    inv_scale = 1.0 / math.sqrt(D)

    # Head-major weight layout so per-head slices are selected by the BlockSpec
    # index_map (block last-two-dims == full array last-two-dims, legal for any D).
    def per_head_in(w, b):  # (E, E) -> (H, E, D),  (E,) -> (H, 1, D)
        return (w.reshape(E, num_heads, D).transpose(1, 0, 2),
                b.reshape(num_heads, 1, D))

    wq_h, bq_h = per_head_in(params["wq"], params["bq"])
    wk_h, bk_h = per_head_in(params["wk"], params["bk"])
    wv_h, bv_h = per_head_in(params["wv"], params["bv"])
    wo_h = params["wo"].reshape(num_heads, D, E)      # row-block h of Wo
    bo = params["bo"].reshape(1, E)

    # Q-tile size: full T for short sequences, else 256 rows (multiple of 8).
    bt = T if T <= block_t else block_t
    n_t = pl.cdiv(T, bt)
    grid = (B, n_t, num_heads)

    q_spec = pl.BlockSpec((1, bt, E), lambda b, t, h: (b, t, 0))
    kv_spec = pl.BlockSpec((1, S, E), lambda b, t, h: (b, 0, 0))
    w_in_spec = pl.BlockSpec((1, E, D), lambda b, t, h: (h, 0, 0))
    b_in_spec = pl.BlockSpec((1, 1, D), lambda b, t, h: (h, 0, 0))
    wo_spec = pl.BlockSpec((1, D, E), lambda b, t, h: (h, 0, 0))
    bo_spec = pl.BlockSpec((1, E), lambda b, t, h: (0, 0))
    out_spec = pl.BlockSpec((1, bt, E), lambda b, t, h: (b, t, 0))

    kernel = functools.partial(_mha_kernel, inv_scale=inv_scale)

    # TODO(synk): for very long S, add a KV grid axis with an online-softmax
    # (flash-style) accumulator instead of loading the full (S, E) K/V block.
    # TODO(synk): attn_mask is not supported (module default is None).
    # TODO(synk): for best lane utilization pad E / head_dim to multiples of 128
    # outside the kernel; kept native here to preserve exact module semantics.
    return pl.pallas_call(
        kernel,
        out_shape=jax.ShapeDtypeStruct((B, T, E), q.dtype),
        grid_spec=pltpu.PrefetchScalarGridSpec(
            num_scalar_prefetch=0,
            grid=grid,
            in_specs=[q_spec, kv_spec, kv_spec,
                      w_in_spec, b_in_spec, w_in_spec, b_in_spec,
                      w_in_spec, b_in_spec, wo_spec, bo_spec],
            out_specs=out_spec,
            scratch_shapes=[pltpu.VMEM((bt, E), jnp.float32)],
        ),
        compiler_params=pltpu.CompilerParams(
            dimension_semantics=("parallel", "parallel", "arbitrary"),
            # Above v6e's 32 MiB scoped default, below v7x's 64 MiB physical VMEM.
            vmem_limit_bytes=48 * 1024 * 1024,
        ),
    )(q, k, v,
      wq_h, bq_h, wk_h, bk_h, wv_h, bv_h, wo_h, bo)


def init_params(key, embed_dim):
    """Deterministic init mimicking nn.Linear's uniform(-1/sqrt(E), 1/sqrt(E))."""
    bound = 1.0 / math.sqrt(embed_dim)
    keys = jax.random.split(key, 8)

    def u(k, shape):
        return jax.random.uniform(k, shape, jnp.float32, -bound, bound)

    return {
        "wq": u(keys[0], (embed_dim, embed_dim)), "bq": u(keys[1], (embed_dim,)),
        "wk": u(keys[2], (embed_dim, embed_dim)), "bk": u(keys[3], (embed_dim,)),
        "wv": u(keys[4], (embed_dim, embed_dim)), "bv": u(keys[5], (embed_dim,)),
        "wo": u(keys[6], (embed_dim, embed_dim)), "bo": u(keys[7], (embed_dim,)),
    }


def reference_mha(q, k, v, params, *, num_heads: int):
    """Plain-JAX reference matching the PyTorch forward (dropout=0, mask=None)."""
    B, T, E = q.shape
    S = k.shape[1]
    D = E // num_heads
    scale = math.sqrt(D)

    def proj(x, w, b):
        return x @ w + b

    qp = proj(q, params["wq"], params["bq"]).reshape(B, T, num_heads, D).transpose(0, 2, 1, 3)
    kp = proj(k, params["wk"], params["bk"]).reshape(B, S, num_heads, D).transpose(0, 2, 1, 3)
    vp = proj(v, params["wv"], params["bv"]).reshape(B, S, num_heads, D).transpose(0, 2, 1, 3)

    attn = jnp.einsum("bhtd,bhsd->bhts", qp, kp) / scale
    attn = jax.nn.softmax(attn, axis=-1)
    out = jnp.einsum("bhts,bhsd->bhtd", attn, vp)
    out = out.transpose(0, 2, 1, 3).reshape(B, T, E)
    return proj(out, params["wo"], params["bo"])


if __name__ == "__main__":
    B, T, S, E, H = 2, 8, 8, 32, 4

    key = jax.random.PRNGKey(0)
    kq, kk, kv, kp = jax.random.split(key, 4)
    q = jax.random.normal(kq, (B, T, E), jnp.float32)
    k = jax.random.normal(kk, (B, S, E), jnp.float32)
    v = jax.random.normal(kv, (B, S, E), jnp.float32)
    params = init_params(kp, E)

    out = jax.block_until_ready(multihead_attention(q, k, v, params, num_heads=H))
    ref = jax.block_until_ready(reference_mha(q, k, v, params, num_heads=H))

    # Tolerance loosened slightly vs. pure-f32 because the softmax denominator
    # uses the approximate EUP reciprocal (pl.reciprocal(..., approx=True)).
    np.testing.assert_allclose(np.asarray(out), np.asarray(ref), rtol=1e-2, atol=1e-2)

    print("KERNEL_OK")
</pallas_src>

<mosaic_0001>
module attributes {stable_mosaic.version = 11 : i64} {
  func.func @_mha_kernel(%arg0: i32, %arg1: i32, %arg2: i32, %arg3: memref<1x8x32xf32, #tpu.memory_space<vmem>>, %arg4: memref<1x8x32xf32, #tpu.memory_space<vmem>>, %arg5: memref<1x8x32xf32, #tpu.memory_space<vmem>>, %arg6: memref<1x32x8xf32, #tpu.memory_space<vmem>>, %arg7: memref<1x1x8xf32, #tpu.memory_space<vmem>>, %arg8: memref<1x32x8xf32, #tpu.memory_space<vmem>>, %arg9: memref<1x1x8xf32, #tpu.memory_space<vmem>>, %arg10: memref<1x32x8xf32, #tpu.memory_space<vmem>>, %arg11: memref<1x1x8xf32, #tpu.memory_space<vmem>>, %arg12: memref<1x8x32xf32, #tpu.memory_space<vmem>>, %arg13: memref<1x32xf32, #tpu.memory_space<vmem>>, %arg14: memref<1x8x32xf32, #tpu.memory_space<vmem>>, %arg15: memref<8x32xf32, #tpu.memory_space<vmem>>) attributes {dimension_semantics = [#tpu.dimension_semantics<parallel>, #tpu.dimension_semantics<parallel>, #tpu.dimension_semantics<arbitrary>], iteration_bounds = array<i64: 2, 1, 4>, scalar_prefetch = 0 : i64, scratch_operands = 1 : i64, tpu.core_type = #tpu.core_type<tc>, window_params = [{transform_indices = @transform_0, window_bounds = array<i64: 1, 8, 32>}, {transform_indices = @transform_1, window_bounds = array<i64: 1, 8, 32>}, {transform_indices = @transform_2, window_bounds = array<i64: 1, 8, 32>}, {transform_indices = @transform_3, window_bounds = array<i64: 1, 32, 8>}, {transform_indices = @transform_4, window_bounds = array<i64: 1, 1, 8>}, {transform_indices = @transform_5, window_bounds = array<i64: 1, 32, 8>}, {transform_indices = @transform_6, window_bounds = array<i64: 1, 1, 8>}, {transform_indices = @transform_7, window_bounds = array<i64: 1, 32, 8>}, {transform_indices = @transform_8, window_bounds = array<i64: 1, 1, 8>}, {transform_indices = @transform_9, window_bounds = array<i64: 1, 8, 32>}, {pipeline_mode = #tpu.pipeline_mode<synchronous>, transform_indices = @transform_10, window_bounds = array<i64: 1, 32>}, {transform_indices = @transform_11, window_bounds = array<i64: 1, 8, 32>}]} {
    %c0_i32 = arith.constant 0 : i32
    %0 = arith.cmpi eq, %arg2, %c0_i32 : i32
    %1 = arith.extui %0 : i1 to i32
    %c0_i32_0 = arith.constant 0 : i32
    %2 = arith.cmpi ne, %1, %c0_i32_0 : i32
    scf.if %2 {
      %cst_43 = arith.constant 0.000000e+00 : f32
      %53 = vector.broadcast %cst_43 : f32 to vector<8x32xf32>
      %c0_44 = arith.constant 0 : index
      %c0_45 = arith.constant 0 : index
      %54 = vector.load %arg15[%c0_44, %c0_45] : memref<8x32xf32, #tpu.memory_space<vmem>>, vector<8x32xf32>
      tpu.vector_store %arg15[%c0_44, %c0_45], %53 {strides = array<i32>} : memref<8x32xf32, #tpu.memory_space<vmem>>, vector<8x32xf32>,
    } else {
    }
    %c0 = arith.constant 0 : index
    %c0_1 = arith.constant 0 : index
    %c0_2 = arith.constant 0 : index
    %3 = vector.load %arg3[%c0, %c0_1, %c0_2] : memref<1x8x32xf32, #tpu.memory_space<vmem>>, vector<1x8x32xf32>
    %4 = vector.shape_cast %3 : vector<1x8x32xf32> to vector<8x32xf32>
    %c0_3 = arith.constant 0 : index
    %c0_4 = arith.constant 0 : index
    %c0_5 = arith.constant 0 : index
    %5 = vector.load %arg4[%c0_3, %c0_4, %c0_5] : memref<1x8x32xf32, #tpu.memory_space<vmem>>, vector<1x8x32xf32>
    %6 = vector.shape_cast %5 : vector<1x8x32xf32> to vector<8x32xf32>
    %c0_6 = arith.constant 0 : index
    %c0_7 = arith.constant 0 : index
    %c0_8 = arith.constant 0 : index
    %7 = vector.load %arg5[%c0_6, %c0_7, %c0_8] : memref<1x8x32xf32, #tpu.memory_space<vmem>>, vector<1x8x32xf32>
    %8 = vector.shape_cast %7 : vector<1x8x32xf32> to vector<8x32xf32>
    %c0_9 = arith.constant 0 : index
    %c0_10 = arith.constant 0 : index
    %c0_11 = arith.constant 0 : index
    %9 = vector.load %arg6[%c0_9, %c0_10, %c0_11] : memref<1x32x8xf32, #tpu.memory_space<vmem>>, vector<1x32x8xf32>
    %10 = vector.shape_cast %9 : vector<1x32x8xf32> to vector<32x8xf32>
    %cst = arith.constant dense<0.000000e+00> : vector<8x8xf32>
    %11 = tpu.matmul %4, %10, %cst {dimension_numbers = #tpu.dot_dimension_numbers<[1], [0], [0], [1], [0, 0, 1, 1], [], []>} : vector<8x32xf32>, vector<32x8xf32>, vector<8x8xf32> -> vector<8x8xf32>
    %c0_12 = arith.constant 0 : index
    %c0_13 = arith.constant 0 : index
    %c0_14 = arith.constant 0 : index
    %12 = vector.load %arg7[%c0_12, %c0_13, %c0_14] : memref<1x1x8xf32, #tpu.memory_space<vmem>>, vector<1x1x8xf32>
    %13 = vector.shape_cast %12 : vector<1x1x8xf32> to vector<1x8xf32>
    %14 = vector.broadcast %13 : vector<1x8xf32> to vector<8x8xf32>
    %15 = arith.addf %11, %14 : vector<8x8xf32>
    %cst_15 = arith.constant 0.353553385 : f32
    %16 = vector.broadcast %cst_15 : f32 to vector<8x8xf32>
    %17 = arith.mulf %15, %16 : vector<8x8xf32>
    %c0_16 = arith.constant 0 : index
    %c0_17 = arith.constant 0 : index
    %c0_18 = arith.constant 0 : index
    %18 = vector.load %arg8[%c0_16, %c0_17, %c0_18] : memref<1x32x8xf32, #tpu.memory_space<vmem>>, vector<1x32x8xf32>
    %19 = vector.shape_cast %18 : vector<1x32x8xf32> to vector<32x8xf32>
    %cst_19 = arith.constant dense<0.000000e+00> : vector<8x8xf32>
    %20 = tpu.matmul %6, %19, %cst_19 {dimension_numbers = #tpu.dot_dimension_numbers<[1], [0], [0], [1], [0, 0, 1, 1], [], []>} : vector<8x32xf32>, vector<32x8xf32>, vector<8x8xf32> -> vector<8x8xf32>
    %c0_20 = arith.constant 0 : index
    %c0_21 = arith.constant 0 : index
    %c0_22 = arith.constant 0 : index
    %21 = vector.load %arg9[%c0_20, %c0_21, %c0_22] : memref<1x1x8xf32, #tpu.memory_space<vmem>>, vector<1x1x8xf32>
    %22 = vector.shape_cast %21 : vector<1x1x8xf32> to vector<1x8xf32>
    %23 = vector.broadcast %22 : vector<1x8xf32> to vector<8x8xf32>
    %24 = arith.addf %20, %23 : vector<8x8xf32>
    %c0_23 = arith.constant 0 : index
    %c0_24 = arith.constant 0 : index
    %c0_25 = arith.constant 0 : index
    %25 = vector.load %arg10[%c0_23, %c0_24, %c0_25] : memref<1x32x8xf32, #tpu.memory_space<vmem>>, vector<1x32x8xf32>
    %26 = vector.shape_cast %25 : vector<1x32x8xf32> to vector<32x8xf32>
    %cst_26 = arith.constant dense<0.000000e+00> : vector<8x8xf32>
    %27 = tpu.matmul %8, %26, %cst_26 {dimension_numbers = #tpu.dot_dimension_numbers<[1], [0], [0], [1], [0, 0, 1, 1], [], []>} : vector<8x32xf32>, vector<32x8xf32>, vector<8x8xf32> -> vector<8x8xf32>
    %c0_27 = arith.constant 0 : index
    %c0_28 = arith.constant 0 : index
    %c0_29 = arith.constant 0 : index
    %28 = vector.load %arg11[%c0_27, %c0_28, %c0_29] : memref<1x1x8xf32, #tpu.memory_space<vmem>>, vector<1x1x8xf32>
    %29 = vector.shape_cast %28 : vector<1x1x8xf32> to vector<1x8xf32>
    %30 = vector.broadcast %29 : vector<1x8xf32> to vector<8x8xf32>
    %31 = arith.addf %27, %30 : vector<8x8xf32>
    %cst_30 = arith.constant dense<0.000000e+00> : vector<8x8xf32>
    %32 = tpu.matmul %17, %24, %cst_30 {dimension_numbers = #tpu.dot_dimension_numbers<[1], [1], [0], [0], [0, 0, 1, 0], [], []>} : vector<8x8xf32>, vector<8x8xf32>, vector<8x8xf32> -> vector<8x8xf32>
    %cst_31 = arith.constant dense<0xFF800000> : vector<8xf32>
    %33 = vector.multi_reduction <maximumf>, %32, %cst_31 [1] : vector<8x8xf32> to vector<8xf32>
    %34 = vector.shape_cast %33 : vector<8xf32> to vector<8x1xf32>
    %35 = vector.broadcast %34 : vector<8x1xf32> to vector<8x8xf32>
    %36 = arith.subf %32, %35 : vector<8x8xf32>
    %37 = math.exp %36 : vector<8x8xf32>
    %cst_32 = arith.constant dense<0.000000e+00> : vector<8xf32>
    %38 = vector.multi_reduction <add>, %37, %cst_32 [1] : vector<8x8xf32> to vector<8xf32>
    %39 = vector.shape_cast %38 : vector<8xf32> to vector<8x1xf32>
    %40 = tpu.reciprocal %39 {approx = true} : vector<8x1xf32> -> vector<8x1xf32>
    %41 = vector.broadcast %40 : vector<8x1xf32> to vector<8x8xf32>
    %42 = arith.mulf %37, %41 : vector<8x8xf32>
    %cst_33 = arith.constant dense<0.000000e+00> : vector<8x8xf32>
    %43 = tpu.matmul %42, %31, %cst_33 {dimension_numbers = #tpu.dot_dimension_numbers<[1], [0], [0], [1], [0, 0, 1, 1], [], []>} : vector<8x8xf32>, vector<8x8xf32>, vector<8x8xf32> -> vector<8x8xf32>
    %c0_34 = arith.constant 0 : index
    %c0_35 = arith.constant 0 : index
    %44 = vector.load %arg15[%c0_34, %c0_35] : memref<8x32xf32, #tpu.memory_space<vmem>>, vector<8x32xf32>
    %c0_36 = arith.constant 0 : index
    %c0_37 = arith.constant 0 : index
    %c0_38 = arith.constant 0 : index
    %45 = vector.load %arg12[%c0_36, %c0_37, %c0_38] : memref<1x8x32xf32, #tpu.memory_space<vmem>>, vector<1x8x32xf32>
    %46 = vector.shape_cast %45 : vector<1x8x32xf32> to vector<8x32xf32>
    %cst_39 = arith.constant dense<0.000000e+00> : vector<8x32xf32>
    %47 = tpu.matmul %43, %46, %cst_39 {dimension_numbers = #tpu.dot_dimension_numbers<[1], [0], [0], [1], [0, 0, 1, 1], [], []>} : vector<8x8xf32>, vector<8x32xf32>, vector<8x32xf32> -> vector<8x32xf32>
    %48 = arith.addf %44, %47 : vector<8x32xf32>
    %c0_40 = arith.constant 0 : index
    %c0_41 = arith.constant 0 : index
    %49 = vector.load %arg15[%c0_40, %c0_41] : memref<8x32xf32, #tpu.memory_space<vmem>>, vector<8x32xf32>
    tpu.vector_store %arg15[%c0_40, %c0_41], %48 {strides = array<i32>} : memref<8x32xf32, #tpu.memory_space<vmem>>, vector<8x32xf32>,
    %c3_i32 = arith.constant 3 : i32
    %50 = arith.cmpi eq, %arg2, %c3_i32 : i32
    %51 = arith.extui %50 : i1 to i32
    %c0_i32_42 = arith.constant 0 : i32
    %52 = arith.cmpi ne, %51, %c0_i32_42 : i32
    scf.if %52 {
      %c0_43 = arith.constant 0 : index
      %c0_44 = arith.constant 0 : index
      %53 = vector.load %arg15[%c0_43, %c0_44] : memref<8x32xf32, #tpu.memory_space<vmem>>, vector<8x32xf32>
      %c0_45 = arith.constant 0 : index
      %c0_46 = arith.constant 0 : index
      %54 = vector.load %arg13[%c0_45, %c0_46] : memref<1x32xf32, #tpu.memory_space<vmem>>, vector<1x32xf32>
      %55 = vector.broadcast %54 : vector<1x32xf32> to vector<8x32xf32>
      %56 = arith.addf %53, %55 : vector<8x32xf32>
      %c0_47 = arith.constant 0 : index
      %c0_48 = arith.constant 0 : index
      %c0_49 = arith.constant 0 : index
      %57 = vector.load %arg14[%c0_47, %c0_48, %c0_49] : memref<1x8x32xf32, #tpu.memory_space<vmem>>, vector<1x8x32xf32>
      %58 = vector.shape_cast %57 : vector<1x8x32xf32> to vector<8x32xf32>
      %59 = vector.shape_cast %56 : vector<8x32xf32> to vector<1x8x32xf32>
      tpu.vector_store %arg14[%c0_47, %c0_48, %c0_49], %59 {strides = array<i32>} : memref<1x8x32xf32, #tpu.memory_space<vmem>>, vector<1x8x32xf32>,
    } else {
    }
    return
  }
  func.func @transform_0(%arg0: i32, %arg1: i32, %arg2: i32) -> (i32, i32, i32) {
    %c0_i32 = arith.constant 0 : i32
    %c0_i32_0 = arith.constant 0 : i32
    return %arg0, %arg1, %c0_i32 : i32, i32, i32
  }
  func.func @transform_1(%arg0: i32, %arg1: i32, %arg2: i32) -> (i32, i32, i32) {
    %c0_i32 = arith.constant 0 : i32
    %c0_i32_0 = arith.constant 0 : i32
    %c0_i32_1 = arith.constant 0 : i32
    return %arg0, %c0_i32, %c0_i32_0 : i32, i32, i32
  }
  func.func @transform_2(%arg0: i32, %arg1: i32, %arg2: i32) -> (i32, i32, i32) {
    %c0_i32 = arith.constant 0 : i32
    %c0_i32_0 = arith.constant 0 : i32
    %c0_i32_1 = arith.constant 0 : i32
    return %arg0, %c0_i32, %c0_i32_0 : i32, i32, i32
  }
  func.func @transform_3(%arg0: i32, %arg1: i32, %arg2: i32) -> (i32, i32, i32) {
    %c0_i32 = arith.constant 0 : i32
    %c0_i32_0 = arith.constant 0 : i32
    %c0_i32_1 = arith.constant 0 : i32
    return %arg2, %c0_i32, %c0_i32_0 : i32, i32, i32
  }
  func.func @transform_4(%arg0: i32, %arg1: i32, %arg2: i32) -> (i32, i32, i32) {
    %c0_i32 = arith.constant 0 : i32
    %c0_i32_0 = arith.constant 0 : i32
    %c0_i32_1 = arith.constant 0 : i32
    return %arg2, %c0_i32, %c0_i32_0 : i32, i32, i32
  }
  func.func @transform_5(%arg0: i32, %arg1: i32, %arg2: i32) -> (i32, i32, i32) {
    %c0_i32 = arith.constant 0 : i32
    %c0_i32_0 = arith.constant 0 : i32
    %c0_i32_1 = arith.constant 0 : i32
    return %arg2, %c0_i32, %c0_i32_0 : i32, i32, i32
  }
  func.func @transform_6(%arg0: i32, %arg1: i32, %arg2: i32) -> (i32, i32, i32) {
    %c0_i32 = arith.constant 0 : i32
    %c0_i32_0 = arith.constant 0 : i32
    %c0_i32_1 = arith.constant 0 : i32
    return %arg2, %c0_i32, %c0_i32_0 : i32, i32, i32
  }
  func.func @transform_7(%arg0: i32, %arg1: i32, %arg2: i32) -> (i32, i32, i32) {
    %c0_i32 = arith.constant 0 : i32
    %c0_i32_0 = arith.constant 0 : i32
    %c0_i32_1 = arith.constant 0 : i32
    return %arg2, %c0_i32, %c0_i32_0 : i32, i32, i32
  }
  func.func @transform_8(%arg0: i32, %arg1: i32, %arg2: i32) -> (i32, i32, i32) {
    %c0_i32 = arith.constant 0 : i32
    %c0_i32_0 = arith.constant 0 : i32
    %c0_i32_1 = arith.constant 0 : i32
    return %arg2, %c0_i32, %c0_i32_0 : i32, i32, i32
  }
  func.func @transform_9(%arg0: i32, %arg1: i32, %arg2: i32) -> (i32, i32, i32) {
    %c0_i32 = arith.constant 0 : i32
    %c0_i32_0 = arith.constant 0 : i32
    %c0_i32_1 = arith.constant 0 : i32
    return %arg2, %c0_i32, %c0_i32_0 : i32, i32, i32
  }
  func.func @transform_10(%arg0: i32, %arg1: i32, %arg2: i32) -> (i32, i32) {
    %c0_i32 = arith.constant 0 : i32
    %c0_i32_0 = arith.constant 0 : i32
    %c0_i32_1 = arith.constant 0 : i32
    return %c0_i32, %c0_i32_0 : i32, i32
  }
  func.func @transform_11(%arg0: i32, %arg1: i32, %arg2: i32) -> (i32, i32, i32) {
    %c0_i32 = arith.constant 0 : i32
    %c0_i32_0 = arith.constant 0 : i32
    return %arg0, %arg1, %c0_i32 : i32, i32, i32
  }
}

</mosaic_0001>

<llo_original>
// kernel: tpu_custom_call.1
$region0: #{tpu_custom_call.1}
  #allocation0 [shape = 'u32[]', space=smem, size = 0x4, offset = 0x4, fixed_abs, tag = 'smem constant byte address 0x4 - core index']
  #allocation1 [shape = 'u32[144,128]{1,0:T(1,128)}', space=vmem, size = 0x12000, scoped, tag = 'internal scratch']
  #allocation2 [shape = 'f32[8,32]{1,0:T(8,128)}', space=vmem, size = 0x1000, scoped, tag = 'scratch operand']
  %s0 = inlined_call_operand.vmem [shape: f32[2,8,32], index: 0, kind: input, shape index: {}]
  %s1 = inlined_call_operand.vmem [shape: f32[2,8,32], index: 1, kind: input, shape index: {}]
  %s2 = inlined_call_operand.vmem [shape: f32[2,8,32], index: 2, kind: input, shape index: {}]
  %s3 = inlined_call_operand.vmem [shape: f32[4,32,8], index: 3, kind: input, shape index: {}]
  %s4 = inlined_call_operand.vmem [shape: f32[4,1,8], index: 4, kind: input, shape index: {}]
  %s5 = inlined_call_operand.vmem [shape: f32[4,32,8], index: 5, kind: input, shape index: {}]
  %s6 = inlined_call_operand.vmem [shape: f32[4,1,8], index: 6, kind: input, shape index: {}]
  %s7 = inlined_call_operand.vmem [shape: f32[4,32,8], index: 7, kind: input, shape index: {}]
  %s8 = inlined_call_operand.vmem [shape: f32[4,1,8], index: 8, kind: input, shape index: {}]
  %s9 = inlined_call_operand.vmem [shape: f32[4,8,32], index: 9, kind: input, shape index: {}]
  %s10 = inlined_call_operand.vmem [shape: f32[1,32], index: 10, kind: input, shape index: {}]
  %s11 = inlined_call_operand.hbm [shape: f32[2,8,32], index: 11, kind: output, shape index: {}]
  %s12 = sld [smem:[#allocation0]]
  $region85: #{tpu_custom_call.1} parent=0
    _
  %s14 = ssub.s32 1, %s12
  %s15 = scalar_select 0, %s14, %s12
  $region1: #{tpu_custom_call.1} parent=0
    #allocation3 [shape = 'u8[8192]{0}', space=vmem, size = 0x2000, scoped, tag = 'output window, operand 0']
    #allocation4 [shape = 's32[2]{0}', space=sflag, size = 0x8, scoped, tag = 'scoped memory for tpu_custom_call.1']
    %16 = vsyncpa [#allocation4], 0
    %s17 = scalar_lea.sflag [#allocation4], 1
    %18 = vsyncpa %s17, 0
    loop: start=0, step=1, limit=10
    $region2: #{tpu_custom_call.1} parent=1 // loop_pre_header
      _
    $region3: #{tpu_custom_call.1} parent=1 // loop_header
      %s20 = sphi 0, %s24
      %p21 = scmp.ge.s32.totalorder %s20, 10
      %s27 = sphi 0, %s46
      %s28 = sphi 0, %s42
      %s29 = sphi 0, %s38
      %s30 = sphi 0, %s27
      %s31 = sphi 0, %s28
      %s32 = sphi 0, %s29
      %s33 = sphi 0, %s30
      %s34 = sphi 0, %s31
      %s35 = sphi 0, %s32
      %s51 = sphi 0, %s53
      %s54 = sphi 0, %s51
      %s55 = sphi 0, %s54
      %s71 = sphi 0, %s55
      %s77 = sphi 0, %s79
      %s80 = sphi 0, %s77
      %s81 = sphi 0, %s80
      %s97 = sphi 0, %s81
      %s103 = sphi 0, %s105
      %s106 = sphi 0, %s103
      %s107 = sphi 0, %s106
      %s123 = sphi 0, %s107
      %s129 = sphi 0, %s131
      %s132 = sphi 0, %s129
      %s133 = sphi 0, %s132
      %s149 = sphi 0, %s133
      %s155 = sphi 0, %s157
      %s158 = sphi 0, %s155
      %s159 = sphi 0, %s158
      %s175 = sphi 0, %s159
      %s181 = sphi 0, %s183
      %s184 = sphi 0, %s181
      %s185 = sphi 0, %s184
      %s201 = sphi 0, %s185
      %s207 = sphi 0, %s209
      %s210 = sphi 0, %s207
      %s211 = sphi 0, %s210
      %s227 = sphi 0, %s211
      %s233 = sphi 0, %s235
      %s236 = sphi 0, %s233
      %s237 = sphi 0, %s236
      %s253 = sphi 0, %s237
      %s259 = sphi 0, %s261
      %s262 = sphi 0, %s259
      %s263 = sphi 0, %s262
      %s279 = sphi 0, %s263
      %s285 = sphi 0, %s287
      %s288 = sphi 0, %s285
      %s289 = sphi 0, %s288
      %s305 = sphi 0, %s289
      %s309 = sphi 0, %s309
      %s311 = sphi 0, %s309
      %s312 = sphi 0, %s311
      %s326 = sphi 0, %s312
      %s334 = sphi 0, %s336
      %s337 = sphi 0, %s334
      %s338 = sphi 0, %s337
      %s354 = sphi 0, %s338
    $region4: #{tpu_custom_call.1} parent=1 // loop_header_branch
      %23 = sbr.rel (%p21) target = $region8
    $region5: #{tpu_custom_call.1} parent=1 // loop_body
      %s25 = ssub.s32 %s20, 1
      %s26 = ssub.s32 %s20, 2
      %s36 = sadd.s32 1, %s29
      %p37 = scmp.ge.s32.totalorder %s36, 4
      %s38 = scalar_select %p37, 0, %s36
      %s39 = sadd.s32 1, %s28
      %s40 = scalar_select %p37, %s39, %s28
      %p41 = scmp.ge.s32.totalorder %s40, 1
      %s42 = scalar_select %p41, 0, %s40
      %s43 = sadd.s32 1, %s27
      %s44 = scalar_select %p41, %s43, %s27
      %p45 = scmp.ge.s32.totalorder %s44, 2
      %s46 = scalar_select %p45, 0, %s44
      %s47 = ssub.s32 %s27, %s46
      %s48 = ssub.s32 %s28, %s42
      %s49 = sor.u32 %s47, %s48
      %p50 = scmp.eq.s32.totalorder %s49, 0
      %s52 = sadd.s32 %s51, 1
      %s53 = scalar_select %p50, %s51, %s52
      %p56 = pneg %p50
      %p57 = scmp.eq.s32.totalorder %s20, 7
      %p58 = por %p56, %p57
      %p59 = scmp.ne.s32.totalorder %s51, %s54
      %p60 = scmp.eq.s32.totalorder %s20, 0
      %p61 = por %p59, %p60
      %p62 = scmp.ne.s32.totalorder %s51, %s54
      %p63 = scmp.eq.s32.totalorder %s25, 7
      %p64 = por %p62, %p63
      %p65 = scmp.ne.s32.totalorder %s54, %s55
      %p66 = scmp.eq.s32.totalorder %s25, 0
      %p67 = por %p65, %p66
      %p68 = scmp.ne.s32.totalorder %s54, %s55
      %p69 = scmp.eq.s32.totalorder %s26, 7
      %p70 = por %p68, %p69
      %p72 = scmp.ne.s32.totalorder %s55, %s71
      %p73 = scmp.eq.s32.totalorder %s26, 0
      %p74 = por %p72, %p73
      %s75 = ssub.s32 %s27, %s46
      %p76 = scmp.eq.s32.totalorder %s75, 0
      %s78 = sadd.s32 %s77, 1
      %s79 = scalar_select %p76, %s77, %s78
      %p82 = pneg %p76
      %p83 = scmp.eq.s32.totalorder %s20, 7
      %p84 = por %p82, %p83
      %p85 = scmp.ne.s32.totalorder %s77, %s80
      %p86 = scmp.eq.s32.totalorder %s20, 0
      %p87 = por %p85, %p86
      %p88 = scmp.ne.s32.totalorder %s77, %s80
      %p89 = scmp.eq.s32.totalorder %s25, 7
      %p90 = por %p88, %p89
      %p91 = scmp.ne.s32.totalorder %s80, %s81
      %p92 = scmp.eq.s32.totalorder %s25, 0
      %p93 = por %p91, %p92
      %p94 = scmp.ne.s32.totalorder %s80, %s81
      %p95 = scmp.eq.s32.totalorder %s26, 7
      %p96 = por %p94, %p95
      %p98 = scmp.ne.s32.totalorder %s81, %s97
      %p99 = scmp.eq.s32.totalorder %s26, 0
      %p100 = por %p98, %p99
      %s101 = ssub.s32 %s27, %s46
      %p102 = scmp.eq.s32.totalorder %s101, 0
      %s104 = sadd.s32 %s103, 1
      %s105 = scalar_select %p102, %s103, %s104
      %p108 = pneg %p102
      %p109 = scmp.eq.s32.totalorder %s20, 7
      %p110 = por %p108, %p109
      %p111 = scmp.ne.s32.totalorder %s103, %s106
      %p112 = scmp.eq.s32.totalorder %s20, 0
      %p113 = por %p111, %p112
      %p114 = scmp.ne.s32.totalorder %s103, %s106
      %p115 = scmp.eq.s32.totalorder %s25, 7
      %p116 = por %p114, %p115
      %p117 = scmp.ne.s32.totalorder %s106, %s107
      %p118 = scmp.eq.s32.totalorder %s25, 0
      %p119 = por %p117, %p118
      %p120 = scmp.ne.s32.totalorder %s106, %s107
      %p121 = scmp.eq.s32.totalorder %s26, 7
      %p122 = por %p120, %p121
      %p124 = scmp.ne.s32.totalorder %s107, %s123
      %p125 = scmp.eq.s32.totalorder %s26, 0
      %p126 = por %p124, %p125
      %s127 = ssub.s32 %s29, %s38
      %p128 = scmp.eq.s32.totalorder %s127, 0
      %s130 = sadd.s32 %s129, 1
      %s131 = scalar_select %p128, %s129, %s130
      %p134 = pneg %p128
      %p135 = scmp.eq.s32.totalorder %s20, 7
      %p136 = por %p134, %p135
      %p137 = scmp.ne.s32.totalorder %s129, %s132
      %p138 = scmp.eq.s32.totalorder %s20, 0
      %p139 = por %p137, %p138
      %p140 = scmp.ne.s32.totalorder %s129, %s132
      %p141 = scmp.eq.s32.totalorder %s25, 7
      %p142 = por %p140, %p141
      %p143 = scmp.ne.s32.totalorder %s132, %s133
      %p144 = scmp.eq.s32.totalorder %s25, 0
      %p145 = por %p143, %p144
      %p146 = scmp.ne.s32.totalorder %s132, %s133
      %p147 = scmp.eq.s32.totalorder %s26, 7
      %p148 = por %p146, %p147
      %p150 = scmp.ne.s32.totalorder %s133, %s149
      %p151 = scmp.eq.s32.totalorder %s26, 0
      %p152 = por %p150, %p151
      %s153 = ssub.s32 %s29, %s38
      %p154 = scmp.eq.s32.totalorder %s153, 0
      %s156 = sadd.s32 %s155, 1
      %s157 = scalar_select %p154, %s155, %s156
      %p160 = pneg %p154
      %p161 = scmp.eq.s32.totalorder %s20, 7
      %p162 = por %p160, %p161
      %p163 = scmp.ne.s32.totalorder %s155, %s158
      %p164 = scmp.eq.s32.totalorder %s20, 0
      %p165 = por %p163, %p164
      %p166 = scmp.ne.s32.totalorder %s155, %s158
      %p167 = scmp.eq.s32.totalorder %s25, 7
      %p168 = por %p166, %p167
      %p169 = scmp.ne.s32.totalorder %s158, %s159
      %p170 = scmp.eq.s32.totalorder %s25, 0
      %p171 = por %p169, %p170
      %p172 = scmp.ne.s32.totalorder %s158, %s159
      %p173 = scmp.eq.s32.totalorder %s26, 7
      %p174 = por %p172, %p173
      %p176 = scmp.ne.s32.totalorder %s159, %s175
      %p177 = scmp.eq.s32.totalorder %s26, 0
      %p178 = por %p176, %p177
      %s179 = ssub.s32 %s29, %s38
      %p180 = scmp.eq.s32.totalorder %s179, 0
      %s182 = sadd.s32 %s181, 1
      %s183 = scalar_select %p180, %s181, %s182
      %p186 = pneg %p180
      %p187 = scmp.eq.s32.totalorder %s20, 7
      %p188 = por %p186, %p187
      %p189 = scmp.ne.s32.totalorder %s181, %s184
      %p190 = scmp.eq.s32.totalorder %s20, 0
      %p191 = por %p189, %p190
      %p192 = scmp.ne.s32.totalorder %s181, %s184
      %p193 = scmp.eq.s32.totalorder %s25, 7
      %p194 = por %p192, %p193
      %p195 = scmp.ne.s32.totalorder %s184, %s185
      %p196 = scmp.eq.s32.totalorder %s25, 0
      %p197 = por %p195, %p196
      %p198 = scmp.ne.s32.totalorder %s184, %s185
      %p199 = scmp.eq.s32.totalorder %s26, 7
      %p200 = por %p198, %p199
      %p202 = scmp.ne.s32.totalorder %s185, %s201
      %p203 = scmp.eq.s32.totalorder %s26, 0
      %p204 = por %p202, %p203
      %s205 = ssub.s32 %s29, %s38
      %p206 = scmp.eq.s32.totalorder %s205, 0
      %s208 = sadd.s32 %s207, 1
      %s209 = scalar_select %p206, %s207, %s208
      %p212 = pneg %p206
      %p213 = scmp.eq.s32.totalorder %s20, 7
      %p214 = por %p212, %p213
      %p215 = scmp.ne.s32.totalorder %s207, %s210
      %p216 = scmp.eq.s32.totalorder %s20, 0
      %p217 = por %p215, %p216
      %p218 = scmp.ne.s32.totalorder %s207, %s210
      %p219 = scmp.eq.s32.totalorder %s25, 7
      %p220 = por %p218, %p219
      %p221 = scmp.ne.s32.totalorder %s210, %s211
      %p222 = scmp.eq.s32.totalorder %s25, 0
      %p223 = por %p221, %p222
      %p224 = scmp.ne.s32.totalorder %s210, %s211
      %p225 = scmp.eq.s32.totalorder %s26, 7
      %p226 = por %p224, %p225
      %p228 = scmp.ne.s32.totalorder %s211, %s227
      %p229 = scmp.eq.s32.totalorder %s26, 0
      %p230 = por %p228, %p229
      %s231 = ssub.s32 %s29, %s38
      %p232 = scmp.eq.s32.totalorder %s231, 0
      %s234 = sadd.s32 %s233, 1
      %s235 = scalar_select %p232, %s233, %s234
      %p238 = pneg %p232
      %p239 = scmp.eq.s32.totalorder %s20, 7
      %p240 = por %p238, %p239
      %p241 = scmp.ne.s32.totalorder %s233, %s236
      %p242 = scmp.eq.s32.totalorder %s20, 0
      %p243 = por %p241, %p242
      %p244 = scmp.ne.s32.totalorder %s233, %s236
      %p245 = scmp.eq.s32.totalorder %s25, 7
      %p246 = por %p244, %p245
      %p247 = scmp.ne.s32.totalorder %s236, %s237
      %p248 = scmp.eq.s32.totalorder %s25, 0
      %p249 = por %p247, %p248
      %p250 = scmp.ne.s32.totalorder %s236, %s237
      %p251 = scmp.eq.s32.totalorder %s26, 7
      %p252 = por %p250, %p251
      %p254 = scmp.ne.s32.totalorder %s237, %s253
      %p255 = scmp.eq.s32.totalorder %s26, 0
      %p256 = por %p254, %p255
      %s257 = ssub.s32 %s29, %s38
      %p258 = scmp.eq.s32.totalorder %s257, 0
      %s260 = sadd.s32 %s259, 1
      %s261 = scalar_select %p258, %s259, %s260
      %p264 = pneg %p258
      %p265 = scmp.eq.s32.totalorder %s20, 7
      %p266 = por %p264, %p265
      %p267 = scmp.ne.s32.totalorder %s259, %s262
      %p268 = scmp.eq.s32.totalorder %s20, 0
      %p269 = por %p267, %p268
      %p270 = scmp.ne.s32.totalorder %s259, %s262
      %p271 = scmp.eq.s32.totalorder %s25, 7
      %p272 = por %p270, %p271
      %p273 = scmp.ne.s32.totalorder %s262, %s263
      %p274 = scmp.eq.s32.totalorder %s25, 0
      %p275 = por %p273, %p274
      %p276 = scmp.ne.s32.totalorder %s262, %s263
      %p277 = scmp.eq.s32.totalorder %s26, 7
      %p278 = por %p276, %p277
      %p280 = scmp.ne.s32.totalorder %s263, %s279
      %p281 = scmp.eq.s32.totalorder %s26, 0
      %p282 = por %p280, %p281
      %s283 = ssub.s32 %s29, %s38
      %p284 = scmp.eq.s32.totalorder %s283, 0
      %s286 = sadd.s32 %s285, 1
      %s287 = scalar_select %p284, %s285, %s286
      %p290 = pneg %p284
      %p291 = scmp.eq.s32.totalorder %s20, 7
      %p292 = por %p290, %p291
      %p293 = scmp.ne.s32.totalorder %s285, %s288
      %p294 = scmp.eq.s32.totalorder %s20, 0
      %p295 = por %p293, %p294
      %p296 = scmp.ne.s32.totalorder %s285, %s288
      %p297 = scmp.eq.s32.totalorder %s25, 7
      %p298 = por %p296, %p297
      %p299 = scmp.ne.s32.totalorder %s288, %s289
      %p300 = scmp.eq.s32.totalorder %s25, 0
      %p301 = por %p299, %p300
      %p302 = scmp.ne.s32.totalorder %s288, %s289
      %p303 = scmp.eq.s32.totalorder %s26, 7
      %p304 = por %p302, %p303
      %p306 = scmp.ne.s32.totalorder %s289, %s305
      %p307 = scmp.eq.s32.totalorder %s26, 0
      %p308 = por %p306, %p307
      %s310 = sadd.s32 %s309, 1
      %p313 = scmp.eq.s32.totalorder %s20, 7
      %p314 = scmp.ne.s32.totalorder %s309, %s311
      %p315 = scmp.eq.s32.totalorder %s20, 0
      %p316 = por %p314, %p315
      %p317 = scmp.ne.s32.totalorder %s309, %s311
      %p318 = scmp.eq.s32.totalorder %s25, 7
      %p319 = por %p317, %p318
      %p320 = scmp.ne.s32.totalorder %s311, %s312
      %p321 = scmp.eq.s32.totalorder %s25, 0
      %p322 = por %p320, %p321
      %p323 = scmp.ne.s32.totalorder %s311, %s312
      %p324 = scmp.eq.s32.totalorder %s26, 7
      %p325 = por %p323, %p324
      %p327 = scmp.ne.s32.totalorder %s312, %s326
      %p328 = scmp.eq.s32.totalorder %s26, 0
      %p329 = por %p327, %p328
      %s330 = ssub.s32 %s27, %s46
      %s331 = ssub.s32 %s28, %s42
      %s332 = sor.u32 %s330, %s331
      %p333 = scmp.eq.s32.totalorder %s332, 0
      %s335 = sadd.s32 %s334, 1
      %s336 = scalar_select %p333, %s334, %s335
      %p339 = pneg %p333
      %p340 = scmp.eq.s32.totalorder %s20, 7
      %p341 = por %p339, %p340
      %p342 = scmp.ne.s32.totalorder %s334, %s337
      %p343 = scmp.eq.s32.totalorder %s20, 0
      %p344 = por %p342, %p343
      %p345 = scmp.ne.s32.totalorder %s334, %s337
      %p346 = scmp.eq.s32.totalorder %s25, 7
      %p347 = por %p345, %p346
      %p348 = scmp.ne.s32.totalorder %s337, %s338
      %p349 = scmp.eq.s32.totalorder %s25, 0
      %p350 = por %p348, %p349
      %p351 = scmp.ne.s32.totalorder %s337, %s338
      %p352 = scmp.eq.s32.totalorder %s26, 7
      %p353 = por %p351, %p352
      %p355 = scmp.ne.s32.totalorder %s338, %s354
      %p356 = scmp.eq.s32.totalorder %s26, 0
      %p357 = por %p355, %p356
      %p358 = scmp.le.s32.totalorder 1, %s20
      %p359 = scmp.lt.s32.totalorder %s20, 9
      %p360 = pnand %p358, %p359
      %p361 = pneg %p360
      // Predicated region
      $region9: #{tpu_custom_call.1} parent=5 // pred_check
        _
      $region10: #{tpu_custom_call.1} parent=5 // pred_check_branch
        %363 = sbr.rel (%p360) target = $region12
      $region11: #{tpu_custom_call.1} parent=5 // pred_region
        %s364 = ssub.s32 %s20, 1
        // Predicated region
        $region13: #{tpu_custom_call.1} parent=11 // pred_check
          %p365 = pneg %p322
        $region14: #{tpu_custom_call.1} parent=11 // pred_check_branch
          %367 = sbr.rel (%p365) target = $region16
        $region15: #{tpu_custom_call.1} parent=11 // pred_region
          _
        $region16: #{tpu_custom_call.1} parent=11 // pred_fallthru
          _
      $region12: #{tpu_custom_call.1} parent=5 // pred_fallthru
        _
      %p368 = scmp.lt.s32.totalorder %s20, 8
      // Predicated region
      $region17: #{tpu_custom_call.1} parent=5 // pred_check
        %p369 = pneg %p368
      $region18: #{tpu_custom_call.1} parent=5 // pred_check_branch
        %371 = sbr.rel (%p369) target = $region20
      $region19: #{tpu_custom_call.1} parent=5 // pred_region
        // Predicated region
        $region21: #{tpu_custom_call.1} parent=19 // pred_check
          %p372 = pneg %p61
        $region22: #{tpu_custom_call.1} parent=19 // pred_check_branch
          %374 = sbr.rel (%p372) target = $region24
        $region23: #{tpu_custom_call.1} parent=19 // pred_region
          %p375 = scmp.lt.s32.totalorder %s27, 1
          %s376 = scalar_select %p375, %s27, 1
          %p377 = scmp.lt.s32.totalorder %s28, 0
          %s378 = scalar_select %p377, %s28, 0
          %s379 = sadd.s32 %s378, %s376
          %s380 = smul.addr %s379, 8
          %s381 = scalar_lea.vmem %s0, %s380
        $region24: #{tpu_custom_call.1} parent=19 // pred_fallthru
          _
        // Predicated region
        $region25: #{tpu_custom_call.1} parent=19 // pred_check
          %p382 = pneg %p87
        $region26: #{tpu_custom_call.1} parent=19 // pred_check_branch
          %384 = sbr.rel (%p382) target = $region28
        $region27: #{tpu_custom_call.1} parent=19 // pred_region
          %p385 = scmp.lt.s32.totalorder %s27, 1
          %s386 = scalar_select %p385, %s27, 1
          %s387 = smul.addr %s386, 8
          %s388 = scalar_lea.vmem %s1, %s387
        $region28: #{tpu_custom_call.1} parent=19 // pred_fallthru
          _
        // Predicated region
        $region29: #{tpu_custom_call.1} parent=19 // pred_check
          %p389 = pneg %p113
        $region30: #{tpu_custom_call.1} parent=19 // pred_check_branch
          %391 = sbr.rel (%p389) target = $region32
        $region31: #{tpu_custom_call.1} parent=19 // pred_region
          %p392 = scmp.lt.s32.totalorder %s27, 1
          %s393 = scalar_select %p392, %s27, 1
          %s394 = smul.addr %s393, 8
          %s395 = scalar_lea.vmem %s2, %s394
        $region32: #{tpu_custom_call.1} parent=19 // pred_fallthru
          _
        // Predicated region
        $region33: #{tpu_custom_call.1} parent=19 // pred_check
          %p396 = pneg %p139
        $region34: #{tpu_custom_call.1} parent=19 // pred_check_branch
          %398 = sbr.rel (%p396) target = $region36
        $region35: #{tpu_custom_call.1} parent=19 // pred_region
          %p399 = scmp.lt.s32.totalorder %s29, 3
          %s400 = scalar_select %p399, %s29, 3
          %s401 = smul.addr %s400, 4
          %s402 = smul.addr %s401, 8
          %s403 = scalar_lea.vmem %s3, %s402
        $region36: #{tpu_custom_call.1} parent=19 // pred_fallthru
          _
        // Predicated region
        $region37: #{tpu_custom_call.1} parent=19 // pred_check
          %p404 = pneg %p165
        $region38: #{tpu_custom_call.1} parent=19 // pred_check_branch
          %406 = sbr.rel (%p404) target = $region40
        $region39: #{tpu_custom_call.1} parent=19 // pred_region
          %p407 = scmp.lt.s32.totalorder %s29, 3
          %s408 = scalar_select %p407, %s29, 3
          %s409 = scalar_lea.vmem %s4, %s408
        $region40: #{tpu_custom_call.1} parent=19 // pred_fallthru
          _
        // Predicated region
        $region41: #{tpu_custom_call.1} parent=19 // pred_check
          %p410 = pneg %p191
        $region42: #{tpu_custom_call.1} parent=19 // pred_check_branch
          %412 = sbr.rel (%p410) target = $region44
        $region43: #{tpu_custom_call.1} parent=19 // pred_region
          %p413 = scmp.lt.s32.totalorder %s29, 3
          %s414 = scalar_select %p413, %s29, 3
          %s415 = smul.addr %s414, 4
          %s416 = smul.addr %s415, 8
          %s417 = scalar_lea.vmem %s5, %s416
        $region44: #{tpu_custom_call.1} parent=19 // pred_fallthru
          _
        // Predicated region
        $region45: #{tpu_custom_call.1} parent=19 // pred_check
          %p418 = pneg %p217
        $region46: #{tpu_custom_call.1} parent=19 // pred_check_branch
          %420 = sbr.rel (%p418) target = $region48
        $region47: #{tpu_custom_call.1} parent=19 // pred_region
          %p421 = scmp.lt.s32.totalorder %s29, 3
          %s422 = scalar_select %p421, %s29, 3
          %s423 = scalar_lea.vmem %s6, %s422
        $region48: #{tpu_custom_call.1} parent=19 // pred_fallthru
          _
        // Predicated region
        $region49: #{tpu_custom_call.1} parent=19 // pred_check
          %p424 = pneg %p243
        $region50: #{tpu_custom_call.1} parent=19 // pred_check_branch
          %426 = sbr.rel (%p424) target = $region52
        $region51: #{tpu_custom_call.1} parent=19 // pred_region
          %p427 = scmp.lt.s32.totalorder %s29, 3
          %s428 = scalar_select %p427, %s29, 3
          %s429 = smul.addr %s428, 4
          %s430 = smul.addr %s429, 8
          %s431 = scalar_lea.vmem %s7, %s430
        $region52: #{tpu_custom_call.1} parent=19 // pred_fallthru
          _
        // Predicated region
        $region53: #{tpu_custom_call.1} parent=19 // pred_check
          %p432 = pneg %p269
        $region54: #{tpu_custom_call.1} parent=19 // pred_check_branch
          %434 = sbr.rel (%p432) target = $region56
        $region55: #{tpu_custom_call.1} parent=19 // pred_region
          %p435 = scmp.lt.s32.totalorder %s29, 3
          %s436 = scalar_select %p435, %s29, 3
          %s437 = scalar_lea.vmem %s8, %s436
        $region56: #{tpu_custom_call.1} parent=19 // pred_fallthru
          _
        // Predicated region
        $region57: #{tpu_custom_call.1} parent=19 // pred_check
          %p438 = pneg %p295
        $region58: #{tpu_custom_call.1} parent=19 // pred_check_branch
          %440 = sbr.rel (%p438) target = $region60
        $region59: #{tpu_custom_call.1} parent=19 // pred_region
          %p441 = scmp.lt.s32.totalorder %s29, 3
          %s442 = scalar_select %p441, %s29, 3
          %s443 = smul.addr %s442, 8
          %s444 = scalar_lea.vmem %s9, %s443
        $region60: #{tpu_custom_call.1} parent=19 // pred_fallthru
          _
      $region20: #{tpu_custom_call.1} parent=5 // pred_fallthru
        _
      %p445 = scmp.le.s32.totalorder 1, %s20
      %p446 = scmp.lt.s32.totalorder %s20, 9
      %p447 = pnand %p445, %p446
      %p448 = pneg %p447
      // Predicated region
      $region61: #{tpu_custom_call.1} parent=5 // pred_check
        _
      $region62: #{tpu_custom_call.1} parent=5 // pred_check_branch
        %450 = sbr.rel (%p447) target = $region64
      $region63: #{tpu_custom_call.1} parent=5 // pred_region
        %s451 = ssub.s32 %s20, 1
        %p452 = scmp.lt.s32.totalorder %s30, 1
        %s453 = scalar_select %p452, %s30, 1
        %p454 = scmp.lt.s32.totalorder %s31, 0
        %s455 = scalar_select %p454, %s31, 0
        %s456 = sadd.s32 %s455, %s453
        %s457 = smul.addr %s456, 8
        %s458 = scalar_lea.vmem %s0, %s457
        %p459 = pneg %p67
        %p460 = pneg %p64
        %p461 = scmp.lt.s32.totalorder %s30, 1
        %s462 = scalar_select %p461, %s30, 1
        %s463 = smul.addr %s462, 8
        %s464 = scalar_lea.vmem %s1, %s463
        %p465 = pneg %p93
        %p466 = pneg %p90
        %p467 = scmp.lt.s32.totalorder %s30, 1
        %s468 = scalar_select %p467, %s30, 1
        %s469 = smul.addr %s468, 8
        %s470 = scalar_lea.vmem %s2, %s469
        %p471 = pneg %p119
        %p472 = pneg %p116
        %p473 = scmp.lt.s32.totalorder %s32, 3
        %s474 = scalar_select %p473, %s32, 3
        %s475 = smul.addr %s474, 4
        %s476 = smul.addr %s475, 8
        %s477 = scalar_lea.vmem %s3, %s476
        %p478 = pneg %p145
        %p479 = pneg %p142
        %p480 = scmp.lt.s32.totalorder %s32, 3
        %s481 = scalar_select %p480, %s32, 3
        %s482 = scalar_lea.vmem %s4, %s481
        %p483 = pneg %p171
        %p484 = pneg %p168
        %p485 = scmp.lt.s32.totalorder %s32, 3
        %s486 = scalar_select %p485, %s32, 3
        %s487 = smul.addr %s486, 4
        %s488 = smul.addr %s487, 8
        %s489 = scalar_lea.vmem %s5, %s488
        %p490 = pneg %p197
        %p491 = pneg %p194
        %p492 = scmp.lt.s32.totalorder %s32, 3
        %s493 = scalar_select %p492, %s32, 3
        %s494 = scalar_lea.vmem %s6, %s493
        %p495 = pneg %p223
        %p496 = pneg %p220
        %p497 = scmp.lt.s32.totalorder %s32, 3
        %s498 = scalar_select %p497, %s32, 3
        %s499 = smul.addr %s498, 4
        %s500 = smul.addr %s499, 8
        %s501 = scalar_lea.vmem %s7, %s500
        %p502 = pneg %p249
        %p503 = pneg %p246
        %p504 = scmp.lt.s32.totalorder %s32, 3
        %s505 = scalar_select %p504, %s32, 3
        %s506 = scalar_lea.vmem %s8, %s505
        %p507 = pneg %p275
        %p508 = pneg %p272
        %p509 = scmp.lt.s32.totalorder %s32, 3
        %s510 = scalar_select %p509, %s32, 3
        %s511 = smul.addr %s510, 8
        %s512 = scalar_lea.vmem %s9, %s511
        %p513 = pneg %p301
        %p514 = pneg %p298
        %p515 = pneg %p322
        %p516 = pneg %p319
        %p517 = pneg %p350
        %p518 = pneg %p347
        %s519 = sand.u32 %s337, 1
        %s520 = scalar_lea.sflag [#allocation4], %s519
        %s521 = sand.u32 %s337, 1
        %s522 = smul.addr %s521, 8
        %s523 = scalar_lea.vmem [#allocation3], %s522
        %p524 = scmp.lt.s32.totalorder %s30, 1
        %s525 = scalar_select %p524, %s30, 1
        %p526 = scmp.lt.s32.totalorder %s31, 0
        %s527 = scalar_select %p526, %s31, 0
        %s528 = sadd.s32 %s527, %s525
        %s529 = smul.addr %s528, 8
        %s530 = scalar_lea.vmem %s0, %s529
        %p531 = scmp.lt.s32.totalorder %s30, 1
        %s532 = scalar_select %p531, %s30, 1
        %s533 = smul.addr %s532, 8
        %s534 = scalar_lea.vmem %s1, %s533
        %p535 = scmp.lt.s32.totalorder %s30, 1
        %s536 = scalar_select %p535, %s30, 1
        %s537 = smul.addr %s536, 8
        %s538 = scalar_lea.vmem %s2, %s537
        %p539 = scmp.lt.s32.totalorder %s32, 3
        %s540 = scalar_select %p539, %s32, 3
        %s541 = smul.addr %s540, 4
        %s542 = smul.addr %s541, 8
        %s543 = scalar_lea.vmem %s3, %s542
        %p544 = scmp.lt.s32.totalorder %s32, 3
        %s545 = scalar_select %p544, %s32, 3
        %s546 = scalar_lea.vmem %s4, %s545
        %p547 = scmp.lt.s32.totalorder %s32, 3
        %s548 = scalar_select %p547, %s32, 3
        %s549 = smul.addr %s548, 4
        %s550 = smul.addr %s549, 8
        %s551 = scalar_lea.vmem %s5, %s550
        %p552 = scmp.lt.s32.totalorder %s32, 3
        %s553 = scalar_select %p552, %s32, 3
        %s554 = scalar_lea.vmem %s6, %s553
        %p555 = scmp.lt.s32.totalorder %s32, 3
        %s556 = scalar_select %p555, %s32, 3
        %s557 = smul.addr %s556, 4
        %s558 = smul.addr %s557, 8
        %s559 = scalar_lea.vmem %s7, %s558
        %p560 = scmp.lt.s32.totalorder %s32, 3
        %s561 = scalar_select %p560, %s32, 3
        %s562 = scalar_lea.vmem %s8, %s561
        %p563 = scmp.lt.s32.totalorder %s32, 3
        %s564 = scalar_select %p563, %s32, 3
        %s565 = smul.addr %s564, 8
        %s566 = scalar_lea.vmem %s9, %s565
        %p567 = scmp.eq.s32.totalorder %s32, 0
        // Predicated region
        $region65: #{tpu_custom_call.1} parent=63 // pred_check
          %p568 = pneg %p567
        $region66: #{tpu_custom_call.1} parent=63 // pred_check_branch
          %570 = sbr.rel (%p568) target = $region68
        $region67: #{tpu_custom_call.1} parent=63 // pred_region
          %vm571 = vcmask 261120
          %572 = vst.msk [vmem:[#allocation2] sm:$0xff] %vm571, 0.0
        $region68: #{tpu_custom_call.1} parent=63 // pred_fallthru
          _
        %v573 = vld [vmem:[%s530] sm:$0xff]
        %v574 = vld [vmem:[%s534] sm:$0xff]
        %v575 = vld [vmem:[%s538] sm:$0xff]
        %v576 = vld [vmem:[%s543] sm:$0xff]
        %v577 = vld [vmem:[%s543 + $0x8] sm:$0xff]
        %v578 = vld [vmem:[%s543 + $0x10] sm:$0xff]
        %v579 = vld [vmem:[%s543 + $0x18] sm:$0xff]
        %v580 = vld [vmem:[%s546] sm:$0x1]
        %v582 = vlaneseq
        %v583 = vshrl.u32 %v582, 7
        %v584 = vsub.s32 0, %v583
        %v585 = vrot.slane %v580, %v584
        %vm587 = vcmask 261120
        %v589 = vsel %vm587, %v573, 0
        %591 = vmatprep.subr.mxu0 0.0
        %592 = vmatpush1.msra.mxu0 %v576
        %593 = vmatprep.subr.mxu0 0.0
        %594 = vmatpush1.msra.mxu0 %v577
        %595 = vmatprep.subr.mxu0 0.0
        %596 = vmatpush1.msra.mxu0 %v578
        %597 = vmatprep.subr.mxu0 0.0
        %598 = vmatpush1.msra.mxu0 %v579
        %599 = vmatprep.subr.mxu0 0.0
        %600 = vmatpush1.msra.mxu0 0.0
        %601 = vmatprep.subr.mxu0 0.0
        %602 = vmatpush1.msra.mxu0 0.0
        %603 = vmatprep.subr.mxu0 0.0
        %604 = vmatpush1.msra.mxu0 0.0
        %605 = vmatprep.subr.mxu0 0.0
        %606 = vmatpush1.msra.mxu0 0.0
        %607 = vmatprep.subr.mxu0 0.0
        %608 = vmatpush1.msra.mxu0 0.0
        %609 = vmatprep.subr.mxu0 0.0
        %610 = vmatpush1.msra.mxu0 0.0
        %611 = vmatprep.subr.mxu0 0.0
        %612 = vmatpush1.msra.mxu0 0.0
        %613 = vmatprep.subr.mxu0 0.0
        %614 = vmatpush1.msra.mxu0 0.0
        %615 = vmatprep.subr.mxu0 0.0
        %616 = vmatpush1.msra.mxu0 0.0
        %617 = vmatprep.subr.mxu0 0.0
        %618 = vmatpush1.msra.mxu0 0.0
        %619 = vmatprep.subr.mxu0 0.0
        %620 = vmatpush1.msra.mxu0 0.0
        %621 = vmatprep.subr.mxu0 0.0
        %622 = vmatpush1.msra.mxu0 0.0
        %623 = vmatprep.subr.mxu0 0.0
        %624 = vmatpush1.msra.mxu0 0.0
        %625 = vmatprep.subr.mxu0 0.0
        %626 = vmatpush1.msra.mxu0 0.0
        %627 = vmatprep.subr.mxu0 0.0
        %628 = vmatpush1.msra.mxu0 0.0
        %629 = vmatprep.subr.mxu0 0.0
        %630 = vmatpush1.msra.mxu0 0.0
        %631 = vmatprep.subr.mxu0 0.0
        %632 = vmatpush1.msra.mxu0 0.0
        %633 = vmatprep.subr.mxu0 0.0
        %634 = vmatpush1.msra.mxu0 0.0
        %635 = vmatprep.subr.mxu0 0.0
        %636 = vmatpush1.msra.mxu0 0.0
        %637 = vmatprep.subr.mxu0 0.0
        %638 = vmatpush1.msra.mxu0 0.0
        %639 = vmatprep.subr.mxu0 0.0
        %640 = vmatpush1.msra.mxu0 0.0
        %641 = vmatprep.subr.mxu0 0.0
        %642 = vmatpush1.msra.mxu0 0.0
        %643 = vmatprep.subr.mxu0 0.0
        %644 = vmatpush1.msra.mxu0 0.0
        %645 = vmatprep.subr.mxu0 0.0
        %646 = vmatpush1.msra.mxu0 0.0
        %647 = vmatprep.subr.mxu0 0.0
        %648 = vmatpush1.msra.mxu0 0.0
        %649 = vmatprep.subr.mxu0 0.0
        %650 = vmatpush1.msra.mxu0 0.0
        %651 = vmatprep.subr.mxu0 0.0
        %652 = vmatpush1.msra.mxu0 0.0
        %653 = vmatprep.subr.mxu0 0.0
        %654 = vmatpush1.msra.mxu0 0.0
        %655 = vmatprep.mubr.f32.mxu0 0.0
        %656 = vmatmul.mubr.f32.gmra.mrb[0].mxu0 %v589
        %v657 = vpop.f32.mrb[0].mxu0
        %v658 = vadd.f32 %v585, %v657
        %v659 = vpop.f32.mrb[0].mxu0
        %660 = vdwg.mxu0
        %v661 = vmul.f32 %v658, 0.35355338
        %v662 = vld [vmem:[%s551] sm:$0xff]
        %v663 = vld [vmem:[%s551 + $0x8] sm:$0xff]
        %v664 = vld [vmem:[%s551 + $0x10] sm:$0xff]
        %v665 = vld [vmem:[%s551 + $0x18] sm:$0xff]
        %v666 = vld [vmem:[%s554] sm:$0x1]
        %v668 = vlaneseq
        %v669 = vshrl.u32 %v668, 7
        %v670 = vsub.s32 0, %v669
        %v671 = vrot.slane %v666, %v670
        %v674 = vsel %vm587, %v574, 0
        %676 = vmatprep.subr.mxu0 0.0
        %677 = vmatpush1.msra.mxu0 %v662
        %678 = vmatprep.subr.mxu0 0.0
        %679 = vmatpush1.msra.mxu0 %v663
        %680 = vmatprep.subr.mxu0 0.0
        %681 = vmatpush1.msra.mxu0 %v664
        %682 = vmatprep.subr.mxu0 0.0
        %683 = vmatpush1.msra.mxu0 %v665
        %684 = vmatprep.subr.mxu0 0.0
        %685 = vmatpush1.msra.mxu0 0.0
        %686 = vmatprep.subr.mxu0 0.0
        %687 = vmatpush1.msra.mxu0 0.0
        %688 = vmatprep.subr.mxu0 0.0
        %689 = vmatpush1.msra.mxu0 0.0
        %690 = vmatprep.subr.mxu0 0.0
        %691 = vmatpush1.msra.mxu0 0.0
        %692 = vmatprep.subr.mxu0 0.0
        %693 = vmatpush1.msra.mxu0 0.0
        %694 = vmatprep.subr.mxu0 0.0
        %695 = vmatpush1.msra.mxu0 0.0
        %696 = vmatprep.subr.mxu0 0.0
        %697 = vmatpush1.msra.mxu0 0.0
        %698 = vmatprep.subr.mxu0 0.0
        %699 = vmatpush1.msra.mxu0 0.0
        %700 = vmatprep.subr.mxu0 0.0
        %701 = vmatpush1.msra.mxu0 0.0
        %702 = vmatprep.subr.mxu0 0.0
        %703 = vmatpush1.msra.mxu0 0.0
        %704 = vmatprep.subr.mxu0 0.0
        %705 = vmatpush1.msra.mxu0 0.0
        %706 = vmatprep.subr.mxu0 0.0
        %707 = vmatpush1.msra.mxu0 0.0
        %708 = vmatprep.subr.mxu0 0.0
        %709 = vmatpush1.msra.mxu0 0.0
        %710 = vmatprep.subr.mxu0 0.0
        %711 = vmatpush1.msra.mxu0 0.0
        %712 = vmatprep.subr.mxu0 0.0
        %713 = vmatpush1.msra.mxu0 0.0
        %714 = vmatprep.subr.mxu0 0.0
        %715 = vmatpush1.msra.mxu0 0.0
        %716 = vmatprep.subr.mxu0 0.0
        %717 = vmatpush1.msra.mxu0 0.0
        %718 = vmatprep.subr.mxu0 0.0
        %719 = vmatpush1.msra.mxu0 0.0
        %720 = vmatprep.subr.mxu0 0.0
        %721 = vmatpush1.msra.mxu0 0.0
        %722 = vmatprep.subr.mxu0 0.0
        %723 = vmatpush1.msra.mxu0 0.0
        %724 = vmatprep.subr.mxu0 0.0
        %725 = vmatpush1.msra.mxu0 0.0
        %726 = vmatprep.subr.mxu0 0.0
        %727 = vmatpush1.msra.mxu0 0.0
        %728 = vmatprep.subr.mxu0 0.0
        %729 = vmatpush1.msra.mxu0 0.0
        %730 = vmatprep.subr.mxu0 0.0
        %731 = vmatpush1.msra.mxu0 0.0
        %732 = vmatprep.subr.mxu0 0.0
        %733 = vmatpush1.msra.mxu0 0.0
        %734 = vmatprep.subr.mxu0 0.0
        %735 = vmatpush1.msra.mxu0 0.0
        %736 = vmatprep.subr.mxu0 0.0
        %737 = vmatpush1.msra.mxu0 0.0
        %738 = vmatprep.subr.mxu0 0.0
        %739 = vmatpush1.msra.mxu0 0.0
        %740 = vmatprep.mubr.f32.mxu0 0.0
        %741 = vmatmul.mubr.f32.gmra.mrb[0].mxu0 %v674
        %v742 = vpop.f32.mrb[0].mxu0
        %v743 = vadd.f32 %v671, %v742
        %v744 = vpop.f32.mrb[0].mxu0
        %745 = vdwg.mxu0
        %v746 = vld [vmem:[%s559] sm:$0xff]
        %v747 = vld [vmem:[%s559 + $0x8] sm:$0xff]
        %v748 = vld [vmem:[%s559 + $0x10] sm:$0xff]
        %v749 = vld [vmem:[%s559 + $0x18] sm:$0xff]
        %v750 = vld [vmem:[%s562] sm:$0x1]
        %v752 = vlaneseq
        %v753 = vshrl.u32 %v752, 7
        %v754 = vsub.s32 0, %v753
        %v755 = vrot.slane %v750, %v754
        %v758 = vsel %vm587, %v575, 0
        %760 = vmatprep.subr.mxu0 0.0
        %761 = vmatpush1.msra.mxu0 %v746
        %762 = vmatprep.subr.mxu0 0.0
        %763 = vmatpush1.msra.mxu0 %v747
        %764 = vmatprep.subr.mxu0 0.0
        %765 = vmatpush1.msra.mxu0 %v748
        %766 = vmatprep.subr.mxu0 0.0
        %767 = vmatpush1.msra.mxu0 %v749
        %768 = vmatprep.subr.mxu0 0.0
        %769 = vmatpush1.msra.mxu0 0.0
        %770 = vmatprep.subr.mxu0 0.0
        %771 = vmatpush1.msra.mxu0 0.0
        %772 = vmatprep.subr.mxu0 0.0
        %773 = vmatpush1.msra.mxu0 0.0
        %774 = vmatprep.subr.mxu0 0.0
        %775 = vmatpush1.msra.mxu0 0.0
        %776 = vmatprep.subr.mxu0 0.0
        %777 = vmatpush1.msra.mxu0 0.0
        %778 = vmatprep.subr.mxu0 0.0
        %779 = vmatpush1.msra.mxu0 0.0
        %780 = vmatprep.subr.mxu0 0.0
        %781 = vmatpush1.msra.mxu0 0.0
        %782 = vmatprep.subr.mxu0 0.0
        %783 = vmatpush1.msra.mxu0 0.0
        %784 = vmatprep.subr.mxu0 0.0
        %785 = vmatpush1.msra.mxu0 0.0
        %786 = vmatprep.subr.mxu0 0.0
        %787 = vmatpush1.msra.mxu0 0.0
        %788 = vmatprep.subr.mxu0 0.0
        %789 = vmatpush1.msra.mxu0 0.0
        %790 = vmatprep.subr.mxu0 0.0
        %791 = vmatpush1.msra.mxu0 0.0
        %792 = vmatprep.subr.mxu0 0.0
        %793 = vmatpush1.msra.mxu0 0.0
        %794 = vmatprep.subr.mxu0 0.0
        %795 = vmatpush1.msra.mxu0 0.0
        %796 = vmatprep.subr.mxu0 0.0
        %797 = vmatpush1.msra.mxu0 0.0
        %798 = vmatprep.subr.mxu0 0.0
        %799 = vmatpush1.msra.mxu0 0.0
        %800 = vmatprep.subr.mxu0 0.0
        %801 = vmatpush1.msra.mxu0 0.0
        %802 = vmatprep.subr.mxu0 0.0
        %803 = vmatpush1.msra.mxu0 0.0
        %804 = vmatprep.subr.mxu0 0.0
        %805 = vmatpush1.msra.mxu0 0.0
        %806 = vmatprep.subr.mxu0 0.0
        %807 = vmatpush1.msra.mxu0 0.0
        %808 = vmatprep.subr.mxu0 0.0
        %809 = vmatpush1.msra.mxu0 0.0
        %810 = vmatprep.subr.mxu0 0.0
        %811 = vmatpush1.msra.mxu0 0.0
        %812 = vmatprep.subr.mxu0 0.0
        %813 = vmatpush1.msra.mxu0 0.0
        %814 = vmatprep.subr.mxu0 0.0
        %815 = vmatpush1.msra.mxu0 0.0
        %816 = vmatprep.subr.mxu0 0.0
        %817 = vmatpush1.msra.mxu0 0.0
        %818 = vmatprep.subr.mxu0 0.0
        %819 = vmatpush1.msra.mxu0 0.0
        %820 = vmatprep.subr.mxu0 0.0
        %821 = vmatpush1.msra.mxu0 0.0
        %822 = vmatprep.subr.mxu0 0.0
        %823 = vmatpush1.msra.mxu0 0.0
        %824 = vmatprep.mubr.f32.mxu0 0.0
        %825 = vmatmul.mubr.f32.gmra.mrb[0].mxu0 %v758
        %v826 = vpop.f32.mrb[0].mxu0
        %v827 = vadd.f32 %v755, %v826
        %v828 = vpop.f32.mrb[0].mxu0
        %829 = vdwg.mxu0
        %vm830 = vcmask 64512
        %v832 = vsel %vm830, %v661, 0
        %v835 = vsel %vm830, %v743, 0
        %837 = vmatprep.subr.mxu0 0.0
        %838 = vmatpush1.xpose.msra.mxu0 %v835
        %839 = vmatprep.subr.mxu0 0.0
        %840 = vmatpush1.xpose.msra.mxu0 0.0
        %841 = vmatprep.subr.mxu0 0.0
        %842 = vmatpush1.xpose.msra.mxu0 0.0
        %843 = vmatprep.subr.mxu0 0.0
        %844 = vmatpush1.xpose.msra.mxu0 0.0
        %845 = vmatprep.subr.mxu0 0.0
        %846 = vmatpush1.xpose.msra.mxu0 0.0
        %847 = vmatprep.subr.mxu0 0.0
        %848 = vmatpush1.xpose.msra.mxu0 0.0
        %849 = vmatprep.subr.mxu0 0.0
        %850 = vmatpush1.xpose.msra.mxu0 0.0
        %851 = vmatprep.subr.mxu0 0.0
        %852 = vmatpush1.xpose.msra.mxu0 0.0
        %853 = vmatprep.subr.mxu0 0.0
        %854 = vmatpush1.xpose.msra.mxu0 0.0
        %855 = vmatprep.subr.mxu0 0.0
        %856 = vmatpush1.xpose.msra.mxu0 0.0
        %857 = vmatprep.subr.mxu0 0.0
        %858 = vmatpush1.xpose.msra.mxu0 0.0
        %859 = vmatprep.subr.mxu0 0.0
        %860 = vmatpush1.xpose.msra.mxu0 0.0
        %861 = vmatprep.subr.mxu0 0.0
        %862 = vmatpush1.xpose.msra.mxu0 0.0
        %863 = vmatprep.subr.mxu0 0.0
        %864 = vmatpush1.xpose.msra.mxu0 0.0
        %865 = vmatprep.subr.mxu0 0.0
        %866 = vmatpush1.xpose.msra.mxu0 0.0
        %867 = vmatprep.subr.mxu0 0.0
        %868 = vmatpush1.xpose.msra.mxu0 0.0
        %869 = vmatprep.subr.mxu0 0.0
        %870 = vmatpush1.xpose.msra.mxu0 0.0
        %871 = vmatprep.subr.mxu0 0.0
        %872 = vmatpush1.xpose.msra.mxu0 0.0
        %873 = vmatprep.subr.mxu0 0.0
        %874 = vmatpush1.xpose.msra.mxu0 0.0
        %875 = vmatprep.subr.mxu0 0.0
        %876 = vmatpush1.xpose.msra.mxu0 0.0
        %877 = vmatprep.subr.mxu0 0.0
        %878 = vmatpush1.xpose.msra.mxu0 0.0
        %879 = vmatprep.subr.mxu0 0.0
        %880 = vmatpush1.xpose.msra.mxu0 0.0
        %881 = vmatprep.subr.mxu0 0.0
        %882 = vmatpush1.xpose.msra.mxu0 0.0
        %883 = vmatprep.subr.mxu0 0.0
        %884 = vmatpush1.xpose.msra.mxu0 0.0
        %885 = vmatprep.subr.mxu0 0.0
        %886 = vmatpush1.xpose.msra.mxu0 0.0
        %887 = vmatprep.subr.mxu0 0.0
        %888 = vmatpush1.xpose.msra.mxu0 0.0
        %889 = vmatprep.subr.mxu0 0.0
        %890 = vmatpush1.xpose.msra.mxu0 0.0
        %891 = vmatprep.subr.mxu0 0.0
        %892 = vmatpush1.xpose.msra.mxu0 0.0
        %893 = vmatprep.subr.mxu0 0.0
        %894 = vmatpush1.xpose.msra.mxu0 0.0
        %895 = vmatprep.subr.mxu0 0.0
        %896 = vmatpush1.xpose.msra.mxu0 0.0
        %897 = vmatprep.subr.mxu0 0.0
        %898 = vmatpush1.xpose.msra.mxu0 0.0
        %899 = vmatprep.subr.mxu0 0.0
        %900 = vmatpush1.xpose.msra.mxu0 0.0
        %901 = vmatprep.mubr.f32.mxu0 0.0
        %902 = vmatmul.mubr.f32.gmra.mrb[0].mxu0 %v832
        %v903 = vpop.f32.mrb[0].mxu0
        %v904 = vadd.f32 0.0, %v903
        %v905 = vpop.f32.mrb[0].mxu0
        %906 = vdwg.mxu0
        %v907 = vsel %vm830, %v904, -inf
        %908 = vmax.xlane.f32.xlu0 %v907
        %v909 = vpop.xlane.xlu0 %908
        %v910 = vsub.f32 %v904, %v909
        %v911 = vmul.f32 %v910, 1.442695
        %v912 = vpow.pop %v911
        %v913 = vsel %vm830, %v912, 0.0
        %914 = vadd.xlane.f32.xlu0 %v913
        %v915 = vpop.xlane.xlu0 %914
        %v916 = vrcp.pop %v915
        %v917 = vmul.f32 %v912, %v916
        %v919 = vsel %vm830, %v917, 0
        %921 = vmatprep.subr.mxu0 0.0
        %922 = vmatpush1.msra.mxu0 %v827
        %923 = vmatprep.subr.mxu0 0.0
        %924 = vmatpush1.msra.mxu0 0.0
        %925 = vmatprep.subr.mxu0 0.0
        %926 = vmatpush1.msra.mxu0 0.0
        %927 = vmatprep.subr.mxu0 0.0
        %928 = vmatpush1.msra.mxu0 0.0
        %929 = vmatprep.subr.mxu0 0.0
        %930 = vmatpush1.msra.mxu0 0.0
        %931 = vmatprep.subr.mxu0 0.0
        %932 = vmatpush1.msra.mxu0 0.0
        %933 = vmatprep.subr.mxu0 0.0
        %934 = vmatpush1.msra.mxu0 0.0
        %935 = vmatprep.subr.mxu0 0.0
        %936 = vmatpush1.msra.mxu0 0.0
        %937 = vmatprep.subr.mxu0 0.0
        %938 = vmatpush1.msra.mxu0 0.0
        %939 = vmatprep.subr.mxu0 0.0
        %940 = vmatpush1.msra.mxu0 0.0
        %941 = vmatprep.subr.mxu0 0.0
        %942 = vmatpush1.msra.mxu0 0.0
        %943 = vmatprep.subr.mxu0 0.0
        %944 = vmatpush1.msra.mxu0 0.0
        %945 = vmatprep.subr.mxu0 0.0
        %946 = vmatpush1.msra.mxu0 0.0
        %947 = vmatprep.subr.mxu0 0.0
        %948 = vmatpush1.msra.mxu0 0.0
        %949 = vmatprep.subr.mxu0 0.0
        %950 = vmatpush1.msra.mxu0 0.0
        %951 = vmatprep.subr.mxu0 0.0
        %952 = vmatpush1.msra.mxu0 0.0
        %953 = vmatprep.subr.mxu0 0.0
        %954 = vmatpush1.msra.mxu0 0.0
        %955 = vmatprep.subr.mxu0 0.0
        %956 = vmatpush1.msra.mxu0 0.0
        %957 = vmatprep.subr.mxu0 0.0
        %958 = vmatpush1.msra.mxu0 0.0
        %959 = vmatprep.subr.mxu0 0.0
        %960 = vmatpush1.msra.mxu0 0.0
        %961 = vmatprep.subr.mxu0 0.0
        %962 = vmatpush1.msra.mxu0 0.0
        %963 = vmatprep.subr.mxu0 0.0
        %964 = vmatpush1.msra.mxu0 0.0
        %965 = vmatprep.subr.mxu0 0.0
        %966 = vmatpush1.msra.mxu0 0.0
        %967 = vmatprep.subr.mxu0 0.0
        %968 = vmatpush1.msra.mxu0 0.0
        %969 = vmatprep.subr.mxu0 0.0
        %970 = vmatpush1.msra.mxu0 0.0
        %971 = vmatprep.subr.mxu0 0.0
        %972 = vmatpush1.msra.mxu0 0.0
        %973 = vmatprep.subr.mxu0 0.0
        %974 = vmatpush1.msra.mxu0 0.0
        %975 = vmatprep.subr.mxu0 0.0
        %976 = vmatpush1.msra.mxu0 0.0
        %977 = vmatprep.subr.mxu0 0.0
        %978 = vmatpush1.msra.mxu0 0.0
        %979 = vmatprep.subr.mxu0 0.0
        %980 = vmatpush1.msra.mxu0 0.0
        %981 = vmatprep.subr.mxu0 0.0
        %982 = vmatpush1.msra.mxu0 0.0
        %983 = vmatprep.subr.mxu0 0.0
        %984 = vmatpush1.msra.mxu0 0.0
        %985 = vmatprep.mubr.f32.mxu0 0.0
        %986 = vmatmul.mubr.f32.gmra.mrb[0].mxu0 %v919
        %v987 = vpop.f32.mrb[0].mxu0
        %v988 = vadd.f32 0.0, %v987
        %v989 = vpop.f32.mrb[0].mxu0
        %990 = vdwg.mxu0
        %v991 = vld [vmem:[#allocation2] sm:$0xff]
        %v992 = vld [vmem:[%s566] sm:$0xff]
        %v994 = vsel %vm830, %v988, 0
        %996 = vmatprep.subr.mxu0 0.0
        %997 = vmatpush1.msra.mxu0 %v992
        %998 = vmatprep.subr.mxu0 0.0
        %999 = vmatpush1.msra.mxu0 0.0
        %1000 = vmatprep.subr.mxu0 0.0
        %1001 = vmatpush1.msra.mxu0 0.0
        %1002 = vmatprep.subr.mxu0 0.0
        %1003 = vmatpush1.msra.mxu0 0.0
        %1004 = vmatprep.subr.mxu0 0.0
        %1005 = vmatpush1.msra.mxu0 0.0
        %1006 = vmatprep.subr.mxu0 0.0
        %1007 = vmatpush1.msra.mxu0 0.0
        %1008 = vmatprep.subr.mxu0 0.0
        %1009 = vmatpush1.msra.mxu0 0.0
        %1010 = vmatprep.subr.mxu0 0.0
        %1011 = vmatpush1.msra.mxu0 0.0
        %1012 = vmatprep.subr.mxu0 0.0
        %1013 = vmatpush1.msra.mxu0 0.0
        %1014 = vmatprep.subr.mxu0 0.0
        %1015 = vmatpush1.msra.mxu0 0.0
        %1016 = vmatprep.subr.mxu0 0.0
        %1017 = vmatpush1.msra.mxu0 0.0
        %1018 = vmatprep.subr.mxu0 0.0
        %1019 = vmatpush1.msra.mxu0 0.0
        %1020 = vmatprep.subr.mxu0 0.0
        %1021 = vmatpush1.msra.mxu0 0.0
        %1022 = vmatprep.subr.mxu0 0.0
        %1023 = vmatpush1.msra.mxu0 0.0
        %1024 = vmatprep.subr.mxu0 0.0
        %1025 = vmatpush1.msra.mxu0 0.0
        %1026 = vmatprep.subr.mxu0 0.0
        %1027 = vmatpush1.msra.mxu0 0.0
        %1028 = vmatprep.subr.mxu0 0.0
        %1029 = vmatpush1.msra.mxu0 0.0
        %1030 = vmatprep.subr.mxu0 0.0
        %1031 = vmatpush1.msra.mxu0 0.0
        %1032 = vmatprep.subr.mxu0 0.0
        %1033 = vmatpush1.msra.mxu0 0.0
        %1034 = vmatprep.subr.mxu0 0.0
        %1035 = vmatpush1.msra.mxu0 0.0
        %1036 = vmatprep.subr.mxu0 0.0
        %1037 = vmatpush1.msra.mxu0 0.0
        %1038 = vmatprep.subr.mxu0 0.0
        %1039 = vmatpush1.msra.mxu0 0.0
        %1040 = vmatprep.subr.mxu0 0.0
        %1041 = vmatpush1.msra.mxu0 0.0
        %1042 = vmatprep.subr.mxu0 0.0
        %1043 = vmatpush1.msra.mxu0 0.0
        %1044 = vmatprep.subr.mxu0 0.0
        %1045 = vmatpush1.msra.mxu0 0.0
        %1046 = vmatprep.subr.mxu0 0.0
        %1047 = vmatpush1.msra.mxu0 0.0
        %1048 = vmatprep.subr.mxu0 0.0
        %1049 = vmatpush1.msra.mxu0 0.0
        %1050 = vmatprep.subr.mxu0 0.0
        %1051 = vmatpush1.msra.mxu0 0.0
        %1052 = vmatprep.subr.mxu0 0.0
        %1053 = vmatpush1.msra.mxu0 0.0
        %1054 = vmatprep.subr.mxu0 0.0
        %1055 = vmatpush1.msra.mxu0 0.0
        %1056 = vmatprep.subr.mxu0 0.0
        %1057 = vmatpush1.msra.mxu0 0.0
        %1058 = vmatprep.subr.mxu0 0.0
        %1059 = vmatpush1.msra.mxu0 0.0
        %1060 = vmatprep.mubr.f32.mxu0 0.0
        %1061 = vmatmul.mubr.f32.gmra.mrb[0].mxu0 %v994
        %v1062 = vpop.f32.mrb[0].mxu0
        %v1063 = vadd.f32 0.0, %v1062
        %v1064 = vpop.f32.mrb[0].mxu0
        %1065 = vdwg.mxu0
        %v1066 = vadd.f32 %v991, %v1063
        %1067 = vst.msk [vmem:[#allocation2] sm:$0xff] %vm587, %v1066
        %p1068 = scmp.eq.s32.totalorder %s32, 3
        // Predicated region
        $region69: #{tpu_custom_call.1} parent=63 // pred_check
          %p1069 = pneg %p1068
        $region70: #{tpu_custom_call.1} parent=63 // pred_check_branch
          %1071 = sbr.rel (%p1069) target = $region72
        $region71: #{tpu_custom_call.1} parent=63 // pred_region
          %v1072 = vld [vmem:[#allocation2] sm:$0xff]
          %v1073 = vld [vmem:[%s10] sm:$0x1]
          %v1075 = vlaneseq
          %v1076 = vshrl.u32 %v1075, 7
          %v1077 = vsub.s32 0, %v1076
          %v1078 = vrot.slane %v1073, %v1077
          %v1080 = vadd.f32 %v1072, %v1078
          %1081 = vst.msk [vmem:[%s523] sm:$0xff] %vm587, %v1080
        $region72: #{tpu_custom_call.1} parent=63 // pred_fallthru
          _
        %s1082 = sand.u32 %s337, 1
        %s1083 = scalar_lea.sflag [#allocation4], %s1082
        %s1084 = sand.u32 %s337, 1
        %s1085 = smul.addr %s1084, 8
        %s1086 = scalar_lea.vmem [#allocation3], %s1085
        // Predicated region
        $region73: #{tpu_custom_call.1} parent=63 // pred_check
          %p1087 = pneg %p347
        $region74: #{tpu_custom_call.1} parent=63 // pred_check_branch
          %1089 = sbr.rel (%p1087) target = $region76
        $region75: #{tpu_custom_call.1} parent=63 // pred_region
          %s1091 = ssub.s32 128, 128
          %1092 = vsyncadd %s1083, %s1091
          %s1093 = sadd.s32 %s31, %s30
          %s1094 = smul.addr %s1093, 128
          %s1095 = scalar_lea.hbm %s11, %s1094
          %s1097 = sshll.u32 %s1086, 4
          %s1098 = int_to_ptr.vmem [resolvable:$true] %s1097
          %1100 = dma.vmem_to_hbm [thread:$0]  %s1098, 128, %s1095, %s1083
        $region76: #{tpu_custom_call.1} parent=63 // pred_fallthru
          _
      $region64: #{tpu_custom_call.1} parent=5 // pred_fallthru
        _
      %p1101 = scmp.le.s32.totalorder 2, %s20
      // Predicated region
      $region77: #{tpu_custom_call.1} parent=5 // pred_check
        %p1102 = pneg %p1101
      $region78: #{tpu_custom_call.1} parent=5 // pred_check_branch
        %1104 = sbr.rel (%p1102) target = $region80
      $region79: #{tpu_custom_call.1} parent=5 // pred_region
        %s1105 = ssub.s32 %s20, 2
        // Predicated region
        $region81: #{tpu_custom_call.1} parent=79 // pred_check
          %p1106 = pneg %p353
        $region82: #{tpu_custom_call.1} parent=79 // pred_check_branch
          %1108 = sbr.rel (%p1106) target = $region84
        $region83: #{tpu_custom_call.1} parent=79 // pred_region
          %s1109 = sand.u32 %s338, 1
          %s1110 = scalar_lea.sflag [#allocation4], %s1109
          %s1111 = sand.u32 %s338, 1
          %s1112 = smul.addr %s1111, 8
          %s1113 = scalar_lea.vmem [#allocation3], %s1112
          %1114 = dma.done %s1110, 128
        $region84: #{tpu_custom_call.1} parent=79 // pred_fallthru
          _
      $region80: #{tpu_custom_call.1} parent=5 // pred_fallthru
        _
    $region6: #{tpu_custom_call.1} parent=1 // loop_footer
      %s24 = sadd.s32 1, %s20
    $region7: #{tpu_custom_call.1} parent=1 // loop_footer_branch
      %19 = sbr.rel target = $region3
    $region8: #{tpu_custom_call.1} parent=1 // loop_exit
      _
    %1115 = vsyncpa [#allocation4], 1
    %s1116 = scalar_lea.sflag [#allocation4], 1
    %1117 = vsyncpa %s1116, 1

</llo_original>
